<compile_context>
chip_gen: v7x
topology: tpu7x:2x2x1
jax: 0.10.0
libtpu: 0.0.40
codegen_flags: <defaults>
</compile_context>

<pallas_src>
import functools

import jax
import jax.numpy as jnp
from jax import lax
from jax.experimental import pallas as pl
from jax.experimental.pallas import tpu as pltpu


# ---------------------------------------------------------------------------
# Generation-aware budgets / padding / tiling helpers
# ---------------------------------------------------------------------------

_ROW_TILE_THRESHOLD = 256                 # switch to the 2-D (parallel-rows) path here
_TM = 128                                 # row tile for the 2-D path
_MAX_STREAM_BUF_BYTES = 16 * 1024 * 1024  # per streamed buffer (x2 for double buffering)
_HEADROOM_BYTES = 16 * 1024 * 1024        # slack on top of estimated usage for vmem limit


def _round_up(n, m):
    return ((n + m - 1) // m) * m


def _sublane_multiple(dtype):
    # Sub-32-bit dtypes pack along sublanes: 8 rows for f32, 16 for bf16, 32 for int8.
    return {4: 8, 2: 16, 1: 32}.get(jnp.dtype(dtype).itemsize, 8)


def _vmem_capacity_bytes():
    try:
        info = pltpu.get_tpu_info()
        cap = getattr(info, "vmem_capacity_bytes", None)
        if cap:
            return int(cap)
    except Exception:
        pass
    return 64 * 1024 * 1024               # conservative default: v7x per-TensorCore VMEM


def _usable_vmem_bytes():
    cap = _vmem_capacity_bytes()
    # ~48 MiB on v7x, ~96 MiB on v5e/v6e: never request the whole physical VMEM;
    # leave headroom for compiler-internal scratch and pipeline state.
    return max(32 * 1024 * 1024, min((cap * 3) // 4, cap - 8 * 1024 * 1024))


def _choose_tk(k, per_col_bytes, reserved_bytes):
    """Largest lane-aligned (x128) K-tile whose streamed buffers fit the budget."""
    budget = min(_usable_vmem_bytes() - reserved_bytes, 2 * _MAX_STREAM_BUF_BYTES)
    tk = max((budget // per_col_bytes) // 128 * 128, 128)
    return min(tk, _round_up(k, 128))


def _prep(x, dtype=None):
    """NCHW -> zero-padded (M_pad, K_pad) features + sizes / tiling decisions."""
    a, b, c, d = x.shape
    m, k = a * b, c * d
    feats = x.reshape(m, k)
    if dtype is not None:
        feats = feats.astype(dtype)       # e.g. bf16 MXU feed; HBM copy is already narrow
    itemsize = feats.dtype.itemsize
    m_pad = _round_up(m, _sublane_multiple(feats.dtype))
    row_tiled = m_pad >= _ROW_TILE_THRESHOLD
    if row_tiled:
        m_pad = _round_up(m_pad, _TM)
        reserved = 2 * _TM * m_pad * 4                 # (double-buffered) output row block
        per_col = 2 * (_TM + m_pad) * itemsize         # LHS + RHS streams, x2 buffers each
    else:
        reserved = 2 * m_pad * m_pad * 4               # resident G accumulator + target Gram
        per_col = 2 * m_pad * itemsize                 # single F stream, x2 buffers
    tk = _choose_tk(k, per_col, reserved)
    k_pad = _round_up(k, tk)
    if (m_pad, k_pad) != (m, k):
        feats = jnp.pad(feats, ((0, m_pad - m), (0, k_pad - k)))
    vmem_limit = min(_usable_vmem_bytes(), reserved + per_col * tk + _HEADROOM_BYTES)
    return feats, m, k, m_pad, k_pad, tk, row_tiled, vmem_limit


# ---------------------------------------------------------------------------
# Kernels
# ---------------------------------------------------------------------------

def _gram_kernel_1d(f_ref, g_ref, *, inv_scale, precision):
    """K-tiled Gram accumulation: G = (F @ F^T) * inv_scale (single row block)."""
    kk = pl.program_id(0)

    @pl.when(kk == 0)
    def _():
        g_ref[...] = jnp.zeros_like(g_ref)

    f = f_ref[...]
    g_ref[...] += lax.dot_general(
        f, f, (((1,), (1,)), ((), ())),               # contract last dims: no f.T copy
        precision=precision, preferred_element_type=jnp.float32)

    @pl.when(kk == pl.num_programs(0) - 1)
    def _():
        g_ref[...] = g_ref[...] * inv_scale


def _style_loss_kernel_1d(f_ref, t_ref, g_ref, loss_ref, *, inv_scale, inv_mm, precision):
    """Small-M fused path: Gram of the input + MSE vs. the resident target Gram."""
    kk = pl.program_id(0)

    @pl.when(kk == 0)
    def _():
        g_ref[...] = jnp.zeros_like(g_ref)

    f = f_ref[...]
    g_ref[...] += lax.dot_general(
        f, f, (((1,), (1,)), ((), ())),
        precision=precision, preferred_element_type=jnp.float32)

    @pl.when(kk == pl.num_programs(0) - 1)
    def _():
        g = g_ref[...] * inv_scale
        g_ref[...] = g
        diff = g - t_ref[...]
        # mse_loss 'mean' over the TRUE (m, m) Gram; padded rows/cols are zero in
        # both G and the target, so they contribute nothing to the sum.
        loss_ref[0] = jnp.sum(diff * diff) * inv_mm


def _gram_kernel_2d(fl_ref, fr_ref, g_ref, *, inv_scale, precision):
    """Row-tiled Gram: grid=(rows parallel, K arbitrary) for v7x megacore."""
    kk = pl.program_id(1)

    @pl.when(kk == 0)
    def _():
        g_ref[...] = jnp.zeros_like(g_ref)

    g_ref[...] += lax.dot_general(
        fl_ref[...], fr_ref[...], (((1,), (1,)), ((), ())),
        precision=precision, preferred_element_type=jnp.float32)

    @pl.when(kk == pl.num_programs(1) - 1)
    def _():
        g_ref[...] = g_ref[...] * inv_scale


# ---------------------------------------------------------------------------
# Wrappers
# ---------------------------------------------------------------------------

def _gram_padded(feats, m, k, m_pad, k_pad, tk, row_tiled, vmem_limit, precision):
    """Tiled Gram on the already-padded feature matrix; returns padded (M_pad, M_pad)."""
    inv_scale = 1.0 / (m * k)
    itemsize = feats.dtype.itemsize
    if row_tiled:
        grid = (m_pad // _TM, k_pad // tk)
        cost = pl.CostEstimate(
            flops=2 * m_pad * m_pad * k_pad, transcendentals=0,
            bytes_accessed=(m_pad // _TM + 1) * m_pad * k_pad * itemsize
                           + m_pad * m_pad * 4)
        return pl.pallas_call(
            functools.partial(_gram_kernel_2d, inv_scale=inv_scale, precision=precision),
            out_shape=jax.ShapeDtypeStruct((m_pad, m_pad), jnp.float32),
            grid=grid,
            in_specs=[pl.BlockSpec((_TM, tk), lambda i, kk: (i, kk)),     # LHS row tiles
                      pl.BlockSpec((m_pad, tk), lambda i, kk: (0, kk))],  # full RHS panel
            out_specs=pl.BlockSpec((_TM, m_pad), lambda i, kk: (i, 0)),
            compiler_params=pltpu.CompilerParams(
                dimension_semantics=("parallel", "arbitrary"),
                vmem_limit_bytes=vmem_limit),
            cost_estimate=cost,
        )(feats, feats)

    grid = (k_pad // tk,)
    cost = pl.CostEstimate(
        flops=2 * m_pad * m_pad * k_pad, transcendentals=0,
        bytes_accessed=m_pad * k_pad * itemsize + m_pad * m_pad * 4)
    return pl.pallas_call(
        functools.partial(_gram_kernel_1d, inv_scale=inv_scale, precision=precision),
        out_shape=jax.ShapeDtypeStruct((m_pad, m_pad), jnp.float32),
        grid=grid,
        in_specs=[pl.BlockSpec((m_pad, tk), lambda kk: (0, kk))],
        out_specs=pl.BlockSpec((m_pad, m_pad), lambda kk: (0, 0)),
        compiler_params=pltpu.CompilerParams(
            dimension_semantics=("arbitrary",),
            vmem_limit_bytes=vmem_limit),
        cost_estimate=cost,
    )(feats)


def gram_matrix(x, *, use_bf16=False, precision=None):
    """Pallas equivalent of the PyTorch gram_matrix() (unpadded result)."""
    dtype = jnp.bfloat16 if use_bf16 else None
    feats, m, k, m_pad, k_pad, tk, row_tiled, vmem_limit = _prep(x, dtype)
    g = _gram_padded(feats, m, k, m_pad, k_pad, tk, row_tiled, vmem_limit, precision)
    return g if m == m_pad else g[:m, :m]


class StyleLoss:
    """JAX/Pallas port of the PyTorch StyleLoss module (forward semantics)."""

    def __init__(self, target_feature, *, use_bf16=False, precision=None):
        self._dtype = jnp.bfloat16 if use_bf16 else None
        self._precision = precision
        feats, m, k, m_pad, k_pad, tk, row_tiled, vmem_limit = _prep(
            target_feature, self._dtype)
        self._m, self._m_pad = m, m_pad
        # Detached target Gram, computed once with the same tiled kernel path.
        # Kept padded (pad rows/cols are exactly zero) so forward() can use it
        # directly without an extra host-side slice round trip.
        self._target_padded = _gram_padded(
            feats, m, k, m_pad, k_pad, tk, row_tiled, vmem_limit, precision)
        self.target = (self._target_padded if m == m_pad
                       else self._target_padded[:m, :m])
        self.loss = None

    def forward(self, x):
        feats, m, k, m_pad, k_pad, tk, row_tiled, vmem_limit = _prep(x, self._dtype)
        assert m == self._m and m_pad == self._m_pad, \
            "input feature shape must match the target feature shape"
        inv_scale = 1.0 / (m * k)
        inv_mm = 1.0 / (m * m)

        if row_tiled:
            # Large M: Gram on a (parallel rows, arbitrary K) grid so v7x's two
            # TensorCores split the row blocks.  The target Gram is kept OUT of
            # VMEM during the matmul; the O(M^2) MSE is a cheap fused XLA epilogue.
            g_pad = _gram_padded(feats, m, k, m_pad, k_pad, tk, row_tiled,
                                 vmem_limit, self._precision)
            diff = g_pad - self._target_padded
            loss = jnp.sum(diff * diff) * inv_mm
        else:
            # Small M (HBM-bound regime): single fused kernel -- K-tiled Gram
            # accumulation into the resident f32 output block, MSE vs. the
            # (small) resident target Gram in the last-step epilogue.
            itemsize = feats.dtype.itemsize
            cost = pl.CostEstimate(
                flops=2 * m_pad * m_pad * k_pad + 3 * m_pad * m_pad,
                transcendentals=0,
                bytes_accessed=(m_pad * k_pad * itemsize
                                + 2 * m_pad * m_pad * 4 + 4))
            g_pad, loss_arr = pl.pallas_call(
                functools.partial(_style_loss_kernel_1d, inv_scale=inv_scale,
                                  inv_mm=inv_mm, precision=self._precision),
                out_shape=(jax.ShapeDtypeStruct((m_pad, m_pad), jnp.float32),
                           jax.ShapeDtypeStruct((1,), jnp.float32)),
                grid=(k_pad // tk,),
                in_specs=[
                    pl.BlockSpec((m_pad, tk), lambda kk: (0, kk)),      # streamed F tiles
                    pl.BlockSpec((m_pad, m_pad), lambda kk: (0, 0)),    # resident target
                ],
                out_specs=(
                    pl.BlockSpec((m_pad, m_pad), lambda kk: (0, 0)),    # resident accumulator
                    pl.BlockSpec(memory_space=pltpu.MemorySpace.SMEM),  # scalar loss
                ),
                compiler_params=pltpu.CompilerParams(
                    dimension_semantics=("arbitrary",),
                    vmem_limit_bytes=vmem_limit),
                cost_estimate=cost,
            )(feats, self._target_padded)
            loss = loss_arr[0]

        self.G = g_pad if m == m_pad else g_pad[:m, :m]
        self.loss = loss
        # Module forward returns its input unchanged (pass-through layer).
        return x

    __call__ = forward


# ---------------------------------------------------------------------------
# Reference (plain JAX) for verification
# ---------------------------------------------------------------------------

def _gram_ref(x, precision=None):
    a, b, c, d = x.shape
    f = x.reshape(a * b, c * d).astype(jnp.float32)
    return jnp.matmul(f, f.T, precision=precision) / (a * b * c * d)


if __name__ == "__main__":
    key = jax.random.PRNGKey(0)
    k_tgt, k_in, k_tgt2, k_in2 = jax.random.split(key, 4)
    hi = lax.Precision.HIGHEST   # exact f32 parity with the reference for the checks

    # --- Small-M fused path: batch=2, channels=4, 16x16 features -----------
    target_feature = jax.random.normal(k_tgt, (2, 4, 16, 16), dtype=jnp.float32)
    x = jax.random.normal(k_in, (2, 4, 16, 16), dtype=jnp.float32)

    module = StyleLoss(target_feature, precision=hi)
    out = jax.block_until_ready(module(x))
    loss = jax.block_until_ready(module.loss)

    g_ref = _gram_ref(x, hi)
    t_ref = _gram_ref(target_feature, hi)
    loss_ref = jnp.mean((g_ref - t_ref) ** 2)

    assert out.shape == x.shape and jnp.allclose(out, x)
    assert jnp.allclose(module.target, t_ref, rtol=1e-5, atol=1e-6)
    assert jnp.allclose(module.G, g_ref, rtol=1e-5, atol=1e-6)
    assert jnp.allclose(loss, loss_ref, rtol=1e-5, atol=1e-7)
    assert jnp.allclose(gram_matrix(x, precision=hi), g_ref, rtol=1e-5, atol=1e-6)

    # --- Large-M row-tiled path (parallel row axis; MSE fused outside) -----
    target_feature2 = jax.random.normal(k_tgt2, (1, 256, 8, 8), dtype=jnp.float32)
    x2 = jax.random.normal(k_in2, (1, 256, 8, 8), dtype=jnp.float32)
    module2 = StyleLoss(target_feature2, precision=hi)
    out2 = jax.block_until_ready(module2(x2))
    loss2 = jax.block_until_ready(module2.loss)
    g2_ref = _gram_ref(x2, hi)
    t2_ref = _gram_ref(target_feature2, hi)
    loss2_ref = jnp.mean((g2_ref - t2_ref) ** 2)
    assert out2.shape == x2.shape and jnp.allclose(out2, x2)
    assert jnp.allclose(module2.G, g2_ref, rtol=1e-5, atol=1e-6)
    assert jnp.allclose(loss2, loss2_ref, rtol=1e-5, atol=1e-7)

    # --- bf16 MXU-feed performance path (sanity: runs and is finite) -------
    module_bf16 = StyleLoss(target_feature, use_bf16=True)
    jax.block_until_ready(module_bf16(x))
    loss_bf16 = jax.block_until_ready(module_bf16.loss)
    assert jnp.isfinite(loss_bf16)

    print("KERNEL_OK")
</pallas_src>

<mosaic_0001>
module attributes {stable_mosaic.version = 11 : i64} {
  func.func @_gram_kernel_1d(%arg0: i32, %arg1: memref<8x256xf32, #tpu.memory_space<vmem>>, %arg2: memref<8x8xf32, #tpu.memory_space<vmem>>) attributes {dimension_semantics = [#tpu.dimension_semantics<arbitrary>], iteration_bounds = array<i64: 1>, scalar_prefetch = 0 : i64, scratch_operands = 0 : i64, tpu.core_type = #tpu.core_type<tc>, window_params = [{transform_indices = @transform_0, window_bounds = array<i64: 8, 256>}, {pipeline_mode = #tpu.pipeline_mode<synchronous>, transform_indices = @transform_1, window_bounds = array<i64: 8, 8>}]} {
    %c0_i32 = arith.constant 0 : i32
    %0 = arith.cmpi eq, %arg0, %c0_i32 : i32
    %1 = arith.extui %0 : i1 to i32
    %c0_i32_0 = arith.constant 0 : i32
    %2 = arith.cmpi ne, %1, %c0_i32_0 : i32
    scf.if %2 {
      %cst_8 = arith.constant 0.000000e+00 : f32
      %11 = vector.broadcast %cst_8 : f32 to vector<8x8xf32>
      %c0_9 = arith.constant 0 : index
      %c0_10 = arith.constant 0 : index
      %12 = vector.load %arg2[%c0_9, %c0_10] : memref<8x8xf32, #tpu.memory_space<vmem>>, vector<8x8xf32>
      tpu.vector_store %arg2[%c0_9, %c0_10], %11 {strides = array<i32>} : memref<8x8xf32, #tpu.memory_space<vmem>>, vector<8x8xf32>,
    } else {
    }
    %c0 = arith.constant 0 : index
    %c0_1 = arith.constant 0 : index
    %3 = vector.load %arg1[%c0, %c0_1] : memref<8x256xf32, #tpu.memory_space<vmem>>, vector<8x256xf32>
    %c0_2 = arith.constant 0 : index
    %c0_3 = arith.constant 0 : index
    %4 = vector.load %arg2[%c0_2, %c0_3] : memref<8x8xf32, #tpu.memory_space<vmem>>, vector<8x8xf32>
    %cst = arith.constant dense<0.000000e+00> : vector<8x8xf32>
    %5 = tpu.matmul %3, %3, %cst {dimension_numbers = #tpu.dot_dimension_numbers<[1], [1], [0], [0], [0, 0, 1, 0], [], []>, precision = #tpu.contract_precision<fp32>} : vector<8x256xf32>, vector<8x256xf32>, vector<8x8xf32> -> vector<8x8xf32>
    %6 = arith.addf %4, %5 : vector<8x8xf32>
    %c0_4 = arith.constant 0 : index
    %c0_5 = arith.constant 0 : index
    %7 = vector.load %arg2[%c0_4, %c0_5] : memref<8x8xf32, #tpu.memory_space<vmem>>, vector<8x8xf32>
    tpu.vector_store %arg2[%c0_4, %c0_5], %6 {strides = array<i32>} : memref<8x8xf32, #tpu.memory_space<vmem>>, vector<8x8xf32>,
    %c0_i32_6 = arith.constant 0 : i32
    %8 = arith.cmpi eq, %arg0, %c0_i32_6 : i32
    %9 = arith.extui %8 : i1 to i32
    %c0_i32_7 = arith.constant 0 : i32
    %10 = arith.cmpi ne, %9, %c0_i32_7 : i32
    scf.if %10 {
      %c0_8 = arith.constant 0 : index
      %c0_9 = arith.constant 0 : index
      %11 = vector.load %arg2[%c0_8, %c0_9] : memref<8x8xf32, #tpu.memory_space<vmem>>, vector<8x8xf32>
      %cst_10 = arith.constant 4.8828125E-4 : f32
      %12 = vector.broadcast %cst_10 : f32 to vector<8x8xf32>
      %13 = arith.mulf %11, %12 : vector<8x8xf32>
      %c0_11 = arith.constant 0 : index
      %c0_12 = arith.constant 0 : index
      %14 = vector.load %arg2[%c0_11, %c0_12] : memref<8x8xf32, #tpu.memory_space<vmem>>, vector<8x8xf32>
      tpu.vector_store %arg2[%c0_11, %c0_12], %13 {strides = array<i32>} : memref<8x8xf32, #tpu.memory_space<vmem>>, vector<8x8xf32>,
    } else {
    }
    return
  }
  func.func @transform_0(%arg0: i32) -> (i32, i32) {
    %c0_i32 = arith.constant 0 : i32
    %c0_i32_0 = arith.constant 0 : i32
    return %c0_i32, %arg0 : i32, i32
  }
  func.func @transform_1(%arg0: i32) -> (i32, i32) {
    %c0_i32 = arith.constant 0 : i32
    %c0_i32_0 = arith.constant 0 : i32
    %c0_i32_1 = arith.constant 0 : i32
    return %c0_i32, %c0_i32_0 : i32, i32
  }
}

</mosaic_0001>

<llo_original>
// kernel: tpu_custom_call.1
$region0: #{tpu_custom_call.1}
  #allocation0 [shape = 'u32[]', space=smem, size = 0x4, offset = 0x4, fixed_abs, tag = 'smem constant byte address 0x4 - core index']
  #allocation1 [shape = 'u32[144,128]{1,0:T(1,128)}', space=vmem, size = 0x12000, scoped, tag = 'internal scratch']
  %s0 = inlined_call_operand.hbm [shape: f32[8,256], index: 0, kind: input, shape index: {}]
  %s1 = inlined_call_operand.hbm [shape: f32[8,8], index: 1, kind: output, shape index: {}]
  %s2 = sld [smem:[#allocation0]]
  $region26: #{tpu_custom_call.1} parent=0
    _
  %s4 = ssub.s32 1, %s2
  %s5 = scalar_select 0, %s4, %s2
  $region1: #{tpu_custom_call.1} parent=0
    #allocation2 [shape = 'u8[8192]{0}', space=vmem, size = 0x2000, scoped, tag = 'input window, operand 0, single buffered']
    #allocation3 [shape = 's32[1]{0}', space=sflag, size = 0x4, scoped, tag = 'scoped memory for tpu_custom_call.1']
    #allocation4 [shape = 's32[1]{0}', space=sflag, size = 0x4, scoped, tag = 'scoped memory for tpu_custom_call.1']
    #allocation5 [shape = 'u8[4096]{0}', space=vmem, size = 0x1000, scoped, tag = 'output window, operand 0, single buffered']
    %6 = vsyncpa [#allocation3], 0
    %7 = vsyncpa [#allocation4], 0
    // Predicated region
    $region2: #{tpu_custom_call.1} parent=1 // pred_check
      _
    $region3: #{tpu_custom_call.1} parent=1 // pred_check_branch
      %9 = sbr.rel (0) target = $region5
    $region4: #{tpu_custom_call.1} parent=1 // pred_region
      %s11 = ssub.s32 256, 256
      %12 = vsyncadd [#allocation3], %s11
      %s14 = sshll.u32 [#allocation2], 4
      %s15 = int_to_ptr.vmem [resolvable:$true] %s14
      %17 = dma.hbm_to_vmem [thread:$0]  %s0, 256, %s15, [#allocation3]
    $region5: #{tpu_custom_call.1} parent=1 // pred_fallthru
      _
    // Predicated region
    $region6: #{tpu_custom_call.1} parent=1 // pred_check
      _
    $region7: #{tpu_custom_call.1} parent=1 // pred_check_branch
      %19 = sbr.rel (0) target = $region9
    $region8: #{tpu_custom_call.1} parent=1 // pred_region
      %20 = dma.done [#allocation3], 256
    $region9: #{tpu_custom_call.1} parent=1 // pred_fallthru
      _
    %p21 = scmp.eq.s32.totalorder 0, 0
    // Predicated region
    $region10: #{tpu_custom_call.1} parent=1 // pred_check
      %p22 = pneg %p21
    $region11: #{tpu_custom_call.1} parent=1 // pred_check_branch
      %24 = sbr.rel (%p22) target = $region13
    $region12: #{tpu_custom_call.1} parent=1 // pred_region
      %vm25 = vcmask 64512
      %26 = vst.msk [vmem:[#allocation5] sm:$0xff] %vm25, 0.0
    $region13: #{tpu_custom_call.1} parent=1 // pred_fallthru
      _
    %v27 = vld [vmem:[#allocation2] sm:$0xff]
    %v28 = vld [vmem:[#allocation2 + $0x8] sm:$0xff]
    %v29 = vld [vmem:[#allocation5] sm:$0xff]
    %v30 = vand.u32 %v28, 4294901760
    %31 = vmatprep.subr.mxu0 %v30
    %v32 = vand.u32 %v27, 4294901760
    %33 = vmatpush1.xpose.msra.mxu0 %v32
    %34 = vmatprep.subr.mxu0 0.0
    %35 = vmatpush1.xpose.msra.mxu0 0.0
    %36 = vmatprep.subr.mxu0 0.0
    %37 = vmatpush1.xpose.msra.mxu0 0.0
    %38 = vmatprep.subr.mxu0 0.0
    %39 = vmatpush1.xpose.msra.mxu0 0.0
    %40 = vmatprep.subr.mxu0 0.0
    %41 = vmatpush1.xpose.msra.mxu0 0.0
    %42 = vmatprep.subr.mxu0 0.0
    %43 = vmatpush1.xpose.msra.mxu0 0.0
    %44 = vmatprep.subr.mxu0 0.0
    %45 = vmatpush1.xpose.msra.mxu0 0.0
    %46 = vmatprep.subr.mxu0 0.0
    %47 = vmatpush1.xpose.msra.mxu0 0.0
    %48 = vmatprep.subr.mxu0 0.0
    %49 = vmatpush1.xpose.msra.mxu0 0.0
    %50 = vmatprep.subr.mxu0 0.0
    %51 = vmatpush1.xpose.msra.mxu0 0.0
    %52 = vmatprep.subr.mxu0 0.0
    %53 = vmatpush1.xpose.msra.mxu0 0.0
    %54 = vmatprep.subr.mxu0 0.0
    %55 = vmatpush1.xpose.msra.mxu0 0.0
    %56 = vmatprep.subr.mxu0 0.0
    %57 = vmatpush1.xpose.msra.mxu0 0.0
    %58 = vmatprep.subr.mxu0 0.0
    %59 = vmatpush1.xpose.msra.mxu0 0.0
    %60 = vmatprep.subr.mxu0 0.0
    %61 = vmatpush1.xpose.msra.mxu0 0.0
    %62 = vmatprep.subr.mxu0 0.0
    %63 = vmatpush1.xpose.msra.mxu0 0.0
    %64 = vmatprep.subr.mxu0 0.0
    %65 = vmatpush1.xpose.msra.mxu0 0.0
    %66 = vmatprep.subr.mxu0 0.0
    %67 = vmatpush1.xpose.msra.mxu0 0.0
    %68 = vmatprep.subr.mxu0 0.0
    %69 = vmatpush1.xpose.msra.mxu0 0.0
    %70 = vmatprep.subr.mxu0 0.0
    %71 = vmatpush1.xpose.msra.mxu0 0.0
    %72 = vmatprep.subr.mxu0 0.0
    %73 = vmatpush1.xpose.msra.mxu0 0.0
    %74 = vmatprep.subr.mxu0 0.0
    %75 = vmatpush1.xpose.msra.mxu0 0.0
    %76 = vmatprep.subr.mxu0 0.0
    %77 = vmatpush1.xpose.msra.mxu0 0.0
    %78 = vmatprep.subr.mxu0 0.0
    %79 = vmatpush1.xpose.msra.mxu0 0.0
    %80 = vmatprep.subr.mxu0 0.0
    %81 = vmatpush1.xpose.msra.mxu0 0.0
    %82 = vmatprep.subr.mxu0 0.0
    %83 = vmatpush1.xpose.msra.mxu0 0.0
    %84 = vmatprep.subr.mxu0 0.0
    %85 = vmatpush1.xpose.msra.mxu0 0.0
    %86 = vmatprep.subr.mxu0 0.0
    %87 = vmatpush1.xpose.msra.mxu0 0.0
    %88 = vmatprep.subr.mxu0 0.0
    %89 = vmatpush1.xpose.msra.mxu0 0.0
    %90 = vmatprep.subr.mxu0 0.0
    %91 = vmatpush1.xpose.msra.mxu0 0.0
    %92 = vmatprep.subr.mxu0 0.0
    %93 = vmatpush1.xpose.msra.mxu0 0.0
    %94 = vmatprep.subr.mxu0 0.0
    %95 = vmatpush1.xpose.msra.mxu0 0.0
    %v96 = vand.u32 %v28, 4294901760
    %v97 = vsub.f32 %v28, %v96
    %v98 = vand.u32 %v97, 4294901760
    %v99 = vsub.f32 %v97, %v98
    %v100 = vand.u32 %v99, 4294901760
    %101 = vmatprep.mubr.f32.mxu0 %v100
    %v102 = vand.u32 %v27, 4294901760
    %v103 = vsub.f32 %v27, %v102
    %v104 = vand.u32 %v103, 4294901760
    %v105 = vsub.f32 %v103, %v104
    %v106 = vand.u32 %v105, 4294901760
    %107 = vmatmul.mubr.f32.gmra.mrb[0].mxu0 %v106
    %v108 = vpop.f32.mrb[0].mxu0
    %v109 = vadd.f32 0.0, %v108
    %v110 = vpop.f32.mrb[0].mxu0
    %111 = vdwg.mxu0
    %v112 = vand.u32 %v28, 4294901760
    %v113 = vsub.f32 %v28, %v112
    %v114 = vand.u32 %v113, 4294901760
    %v115 = vsub.f32 %v113, %v114
    %v116 = vand.u32 %v115, 4294901760
    %117 = vmatprep.subr.mxu0 %v116
    %v118 = vand.u32 %v27, 4294901760
    %v119 = vsub.f32 %v27, %v118
    %v120 = vand.u32 %v119, 4294901760
    %v121 = vsub.f32 %v119, %v120
    %v122 = vand.u32 %v121, 4294901760
    %123 = vmatpush1.xpose.msra.mxu0 %v122
    %124 = vmatprep.subr.mxu0 0.0
    %125 = vmatpush1.xpose.msra.mxu0 0.0
    %126 = vmatprep.subr.mxu0 0.0
    %127 = vmatpush1.xpose.msra.mxu0 0.0
    %128 = vmatprep.subr.mxu0 0.0
    %129 = vmatpush1.xpose.msra.mxu0 0.0
    %130 = vmatprep.subr.mxu0 0.0
    %131 = vmatpush1.xpose.msra.mxu0 0.0
    %132 = vmatprep.subr.mxu0 0.0
    %133 = vmatpush1.xpose.msra.mxu0 0.0
    %134 = vmatprep.subr.mxu0 0.0
    %135 = vmatpush1.xpose.msra.mxu0 0.0
    %136 = vmatprep.subr.mxu0 0.0
    %137 = vmatpush1.xpose.msra.mxu0 0.0
    %138 = vmatprep.subr.mxu0 0.0
    %139 = vmatpush1.xpose.msra.mxu0 0.0
    %140 = vmatprep.subr.mxu0 0.0
    %141 = vmatpush1.xpose.msra.mxu0 0.0
    %142 = vmatprep.subr.mxu0 0.0
    %143 = vmatpush1.xpose.msra.mxu0 0.0
    %144 = vmatprep.subr.mxu0 0.0
    %145 = vmatpush1.xpose.msra.mxu0 0.0
    %146 = vmatprep.subr.mxu0 0.0
    %147 = vmatpush1.xpose.msra.mxu0 0.0
    %148 = vmatprep.subr.mxu0 0.0
    %149 = vmatpush1.xpose.msra.mxu0 0.0
    %150 = vmatprep.subr.mxu0 0.0
    %151 = vmatpush1.xpose.msra.mxu0 0.0
    %152 = vmatprep.subr.mxu0 0.0
    %153 = vmatpush1.xpose.msra.mxu0 0.0
    %154 = vmatprep.subr.mxu0 0.0
    %155 = vmatpush1.xpose.msra.mxu0 0.0
    %156 = vmatprep.subr.mxu0 0.0
    %157 = vmatpush1.xpose.msra.mxu0 0.0
    %158 = vmatprep.subr.mxu0 0.0
    %159 = vmatpush1.xpose.msra.mxu0 0.0
    %160 = vmatprep.subr.mxu0 0.0
    %161 = vmatpush1.xpose.msra.mxu0 0.0
    %162 = vmatprep.subr.mxu0 0.0
    %163 = vmatpush1.xpose.msra.mxu0 0.0
    %164 = vmatprep.subr.mxu0 0.0
    %165 = vmatpush1.xpose.msra.mxu0 0.0
    %166 = vmatprep.subr.mxu0 0.0
    %167 = vmatpush1.xpose.msra.mxu0 0.0
    %168 = vmatprep.subr.mxu0 0.0
    %169 = vmatpush1.xpose.msra.mxu0 0.0
    %170 = vmatprep.subr.mxu0 0.0
    %171 = vmatpush1.xpose.msra.mxu0 0.0
    %172 = vmatprep.subr.mxu0 0.0
    %173 = vmatpush1.xpose.msra.mxu0 0.0
    %174 = vmatprep.subr.mxu0 0.0
    %175 = vmatpush1.xpose.msra.mxu0 0.0
    %176 = vmatprep.subr.mxu0 0.0
    %177 = vmatpush1.xpose.msra.mxu0 0.0
    %178 = vmatprep.subr.mxu0 0.0
    %179 = vmatpush1.xpose.msra.mxu0 0.0
    %180 = vmatprep.subr.mxu0 0.0
    %181 = vmatpush1.xpose.msra.mxu0 0.0
    %182 = vmatprep.subr.mxu0 0.0
    %183 = vmatpush1.xpose.msra.mxu0 0.0
    %184 = vmatprep.subr.mxu0 0.0
    %185 = vmatpush1.xpose.msra.mxu0 0.0
    %v186 = vand.u32 %v28, 4294901760
    %187 = vmatprep.mubr.f32.mxu0 %v186
    %v188 = vand.u32 %v27, 4294901760
    %189 = vmatmul.mubr.f32.gmra.mrb[0].mxu0 %v188
    %v190 = vpop.f32.mrb[0].mxu0
    %v191 = vadd.f32 %v109, %v190
    %v192 = vpop.f32.mrb[0].mxu0
    %193 = vdwg.mxu0
    %v194 = vand.u32 %v28, 4294901760
    %v195 = vsub.f32 %v28, %v194
    %196 = vmatprep.subr.mxu0 %v195
    %v197 = vand.u32 %v27, 4294901760
    %v198 = vsub.f32 %v27, %v197
    %199 = vmatpush1.xpose.msra.mxu0 %v198
    %200 = vmatprep.subr.mxu0 0.0
    %201 = vmatpush1.xpose.msra.mxu0 0.0
    %202 = vmatprep.subr.mxu0 0.0
    %203 = vmatpush1.xpose.msra.mxu0 0.0
    %204 = vmatprep.subr.mxu0 0.0
    %205 = vmatpush1.xpose.msra.mxu0 0.0
    %206 = vmatprep.subr.mxu0 0.0
    %207 = vmatpush1.xpose.msra.mxu0 0.0
    %208 = vmatprep.subr.mxu0 0.0
    %209 = vmatpush1.xpose.msra.mxu0 0.0
    %210 = vmatprep.subr.mxu0 0.0
    %211 = vmatpush1.xpose.msra.mxu0 0.0
    %212 = vmatprep.subr.mxu0 0.0
    %213 = vmatpush1.xpose.msra.mxu0 0.0
    %214 = vmatprep.subr.mxu0 0.0
    %215 = vmatpush1.xpose.msra.mxu0 0.0
    %216 = vmatprep.subr.mxu0 0.0
    %217 = vmatpush1.xpose.msra.mxu0 0.0
    %218 = vmatprep.subr.mxu0 0.0
    %219 = vmatpush1.xpose.msra.mxu0 0.0
    %220 = vmatprep.subr.mxu0 0.0
    %221 = vmatpush1.xpose.msra.mxu0 0.0
    %222 = vmatprep.subr.mxu0 0.0
    %223 = vmatpush1.xpose.msra.mxu0 0.0
    %224 = vmatprep.subr.mxu0 0.0
    %225 = vmatpush1.xpose.msra.mxu0 0.0
    %226 = vmatprep.subr.mxu0 0.0
    %227 = vmatpush1.xpose.msra.mxu0 0.0
    %228 = vmatprep.subr.mxu0 0.0
    %229 = vmatpush1.xpose.msra.mxu0 0.0
    %230 = vmatprep.subr.mxu0 0.0
    %231 = vmatpush1.xpose.msra.mxu0 0.0
    %232 = vmatprep.subr.mxu0 0.0
    %233 = vmatpush1.xpose.msra.mxu0 0.0
    %234 = vmatprep.subr.mxu0 0.0
    %235 = vmatpush1.xpose.msra.mxu0 0.0
    %236 = vmatprep.subr.mxu0 0.0
    %237 = vmatpush1.xpose.msra.mxu0 0.0
    %238 = vmatprep.subr.mxu0 0.0
    %239 = vmatpush1.xpose.msra.mxu0 0.0
    %240 = vmatprep.subr.mxu0 0.0
    %241 = vmatpush1.xpose.msra.mxu0 0.0
    %242 = vmatprep.subr.mxu0 0.0
    %243 = vmatpush1.xpose.msra.mxu0 0.0
    %244 = vmatprep.subr.mxu0 0.0
    %245 = vmatpush1.xpose.msra.mxu0 0.0
    %246 = vmatprep.subr.mxu0 0.0
    %247 = vmatpush1.xpose.msra.mxu0 0.0
    %248 = vmatprep.subr.mxu0 0.0
    %249 = vmatpush1.xpose.msra.mxu0 0.0
    %250 = vmatprep.subr.mxu0 0.0
    %251 = vmatpush1.xpose.msra.mxu0 0.0
    %252 = vmatprep.subr.mxu0 0.0
    %253 = vmatpush1.xpose.msra.mxu0 0.0
    %254 = vmatprep.subr.mxu0 0.0
    %255 = vmatpush1.xpose.msra.mxu0 0.0
    %256 = vmatprep.subr.mxu0 0.0
    %257 = vmatpush1.xpose.msra.mxu0 0.0
    %258 = vmatprep.subr.mxu0 0.0
    %259 = vmatpush1.xpose.msra.mxu0 0.0
    %260 = vmatprep.subr.mxu0 0.0
    %261 = vmatpush1.xpose.msra.mxu0 0.0
    %v262 = vand.u32 %v28, 4294901760
    %v263 = vsub.f32 %v28, %v262
    %264 = vmatprep.mubr.f32.mxu0 %v263
    %v265 = vand.u32 %v27, 4294901760
    %v266 = vsub.f32 %v27, %v265
    %267 = vmatmul.mubr.f32.gmra.mrb[0].mxu0 %v266
    %v268 = vpop.f32.mrb[0].mxu0
    %v269 = vadd.f32 %v191, %v268
    %v270 = vpop.f32.mrb[0].mxu0
    %271 = vdwg.mxu0
    %v272 = vand.u32 %v28, 4294901760
    %273 = vmatprep.subr.mxu0 %v272
    %v274 = vand.u32 %v27, 4294901760
    %275 = vmatpush1.xpose.msra.mxu0 %v274
    %276 = vmatprep.subr.mxu0 0.0
    %277 = vmatpush1.xpose.msra.mxu0 0.0
    %278 = vmatprep.subr.mxu0 0.0
    %279 = vmatpush1.xpose.msra.mxu0 0.0
    %280 = vmatprep.subr.mxu0 0.0
    %281 = vmatpush1.xpose.msra.mxu0 0.0
    %282 = vmatprep.subr.mxu0 0.0
    %283 = vmatpush1.xpose.msra.mxu0 0.0
    %284 = vmatprep.subr.mxu0 0.0
    %285 = vmatpush1.xpose.msra.mxu0 0.0
    %286 = vmatprep.subr.mxu0 0.0
    %287 = vmatpush1.xpose.msra.mxu0 0.0
    %288 = vmatprep.subr.mxu0 0.0
    %289 = vmatpush1.xpose.msra.mxu0 0.0
    %290 = vmatprep.subr.mxu0 0.0
    %291 = vmatpush1.xpose.msra.mxu0 0.0
    %292 = vmatprep.subr.mxu0 0.0
    %293 = vmatpush1.xpose.msra.mxu0 0.0
    %294 = vmatprep.subr.mxu0 0.0
    %295 = vmatpush1.xpose.msra.mxu0 0.0
    %296 = vmatprep.subr.mxu0 0.0
    %297 = vmatpush1.xpose.msra.mxu0 0.0
    %298 = vmatprep.subr.mxu0 0.0
    %299 = vmatpush1.xpose.msra.mxu0 0.0
    %300 = vmatprep.subr.mxu0 0.0
    %301 = vmatpush1.xpose.msra.mxu0 0.0
    %302 = vmatprep.subr.mxu0 0.0
    %303 = vmatpush1.xpose.msra.mxu0 0.0
    %304 = vmatprep.subr.mxu0 0.0
    %305 = vmatpush1.xpose.msra.mxu0 0.0
    %306 = vmatprep.subr.mxu0 0.0
    %307 = vmatpush1.xpose.msra.mxu0 0.0
    %308 = vmatprep.subr.mxu0 0.0
    %309 = vmatpush1.xpose.msra.mxu0 0.0
    %310 = vmatprep.subr.mxu0 0.0
    %311 = vmatpush1.xpose.msra.mxu0 0.0
    %312 = vmatprep.subr.mxu0 0.0
    %313 = vmatpush1.xpose.msra.mxu0 0.0
    %314 = vmatprep.subr.mxu0 0.0
    %315 = vmatpush1.xpose.msra.mxu0 0.0
    %316 = vmatprep.subr.mxu0 0.0
    %317 = vmatpush1.xpose.msra.mxu0 0.0
    %318 = vmatprep.subr.mxu0 0.0
    %319 = vmatpush1.xpose.msra.mxu0 0.0
    %320 = vmatprep.subr.mxu0 0.0
    %321 = vmatpush1.xpose.msra.mxu0 0.0
    %322 = vmatprep.subr.mxu0 0.0
    %323 = vmatpush1.xpose.msra.mxu0 0.0
    %324 = vmatprep.subr.mxu0 0.0
    %325 = vmatpush1.xpose.msra.mxu0 0.0
    %326 = vmatprep.subr.mxu0 0.0
    %327 = vmatpush1.xpose.msra.mxu0 0.0
    %328 = vmatprep.subr.mxu0 0.0
    %329 = vmatpush1.xpose.msra.mxu0 0.0
    %330 = vmatprep.subr.mxu0 0.0
    %331 = vmatpush1.xpose.msra.mxu0 0.0
    %332 = vmatprep.subr.mxu0 0.0
    %333 = vmatpush1.xpose.msra.mxu0 0.0
    %334 = vmatprep.subr.mxu0 0.0
    %335 = vmatpush1.xpose.msra.mxu0 0.0
    %336 = vmatprep.subr.mxu0 0.0
    %337 = vmatpush1.xpose.msra.mxu0 0.0
    %v338 = vand.u32 %v28, 4294901760
    %v339 = vsub.f32 %v28, %v338
    %v340 = vand.u32 %v339, 4294901760
    %341 = vmatprep.mubr.f32.mxu0 %v340
    %v342 = vand.u32 %v27, 4294901760
    %v343 = vsub.f32 %v27, %v342
    %v344 = vand.u32 %v343, 4294901760
    %345 = vmatmul.mubr.f32.gmra.mrb[0].mxu0 %v344
    %v346 = vpop.f32.mrb[0].mxu0
    %v347 = vadd.f32 %v269, %v346
    %v348 = vpop.f32.mrb[0].mxu0
    %349 = vdwg.mxu0
    %v350 = vand.u32 %v28, 4294901760
    %v351 = vsub.f32 %v28, %v350
    %v352 = vand.u32 %v351, 4294901760
    %353 = vmatprep.subr.mxu0 %v352
    %v354 = vand.u32 %v27, 4294901760
    %v355 = vsub.f32 %v27, %v354
    %v356 = vand.u32 %v355, 4294901760
    %357 = vmatpush1.xpose.msra.mxu0 %v356
    %358 = vmatprep.subr.mxu0 0.0
    %359 = vmatpush1.xpose.msra.mxu0 0.0
    %360 = vmatprep.subr.mxu0 0.0
    %361 = vmatpush1.xpose.msra.mxu0 0.0
    %362 = vmatprep.subr.mxu0 0.0
    %363 = vmatpush1.xpose.msra.mxu0 0.0
    %364 = vmatprep.subr.mxu0 0.0
    %365 = vmatpush1.xpose.msra.mxu0 0.0
    %366 = vmatprep.subr.mxu0 0.0
    %367 = vmatpush1.xpose.msra.mxu0 0.0
    %368 = vmatprep.subr.mxu0 0.0
    %369 = vmatpush1.xpose.msra.mxu0 0.0
    %370 = vmatprep.subr.mxu0 0.0
    %371 = vmatpush1.xpose.msra.mxu0 0.0
    %372 = vmatprep.subr.mxu0 0.0
    %373 = vmatpush1.xpose.msra.mxu0 0.0
    %374 = vmatprep.subr.mxu0 0.0
    %375 = vmatpush1.xpose.msra.mxu0 0.0
    %376 = vmatprep.subr.mxu0 0.0
    %377 = vmatpush1.xpose.msra.mxu0 0.0
    %378 = vmatprep.subr.mxu0 0.0
    %379 = vmatpush1.xpose.msra.mxu0 0.0
    %380 = vmatprep.subr.mxu0 0.0
    %381 = vmatpush1.xpose.msra.mxu0 0.0
    %382 = vmatprep.subr.mxu0 0.0
    %383 = vmatpush1.xpose.msra.mxu0 0.0
    %384 = vmatprep.subr.mxu0 0.0
    %385 = vmatpush1.xpose.msra.mxu0 0.0
    %386 = vmatprep.subr.mxu0 0.0
    %387 = vmatpush1.xpose.msra.mxu0 0.0
    %388 = vmatprep.subr.mxu0 0.0
    %389 = vmatpush1.xpose.msra.mxu0 0.0
    %390 = vmatprep.subr.mxu0 0.0
    %391 = vmatpush1.xpose.msra.mxu0 0.0
    %392 = vmatprep.subr.mxu0 0.0
    %393 = vmatpush1.xpose.msra.mxu0 0.0
    %394 = vmatprep.subr.mxu0 0.0
    %395 = vmatpush1.xpose.msra.mxu0 0.0
    %396 = vmatprep.subr.mxu0 0.0
    %397 = vmatpush1.xpose.msra.mxu0 0.0
    %398 = vmatprep.subr.mxu0 0.0
    %399 = vmatpush1.xpose.msra.mxu0 0.0
    %400 = vmatprep.subr.mxu0 0.0
    %401 = vmatpush1.xpose.msra.mxu0 0.0
    %402 = vmatprep.subr.mxu0 0.0
    %403 = vmatpush1.xpose.msra.mxu0 0.0
    %404 = vmatprep.subr.mxu0 0.0
    %405 = vmatpush1.xpose.msra.mxu0 0.0
    %406 = vmatprep.subr.mxu0 0.0
    %407 = vmatpush1.xpose.msra.mxu0 0.0
    %408 = vmatprep.subr.mxu0 0.0
    %409 = vmatpush1.xpose.msra.mxu0 0.0
    %410 = vmatprep.subr.mxu0 0.0
    %411 = vmatpush1.xpose.msra.mxu0 0.0
    %412 = vmatprep.subr.mxu0 0.0
    %413 = vmatpush1.xpose.msra.mxu0 0.0
    %414 = vmatprep.subr.mxu0 0.0
    %415 = vmatpush1.xpose.msra.mxu0 0.0
    %416 = vmatprep.subr.mxu0 0.0
    %417 = vmatpush1.xpose.msra.mxu0 0.0
    %418 = vmatprep.subr.mxu0 0.0
    %419 = vmatpush1.xpose.msra.mxu0 0.0
    %v420 = vand.u32 %v28, 4294901760
    %421 = vmatprep.mubr.f32.mxu0 %v420
    %v422 = vand.u32 %v27, 4294901760
    %423 = vmatmul.mubr.f32.gmra.mrb[0].mxu0 %v422
    %v424 = vpop.f32.mrb[0].mxu0
    %v425 = vadd.f32 %v347, %v424
    %v426 = vpop.f32.mrb[0].mxu0
    %427 = vdwg.mxu0
    %v428 = vand.u32 %v28, 4294901760
    %429 = vmatprep.subr.mxu0 %v428
    %v430 = vand.u32 %v27, 4294901760
    %431 = vmatpush1.xpose.msra.mxu0 %v430
    %432 = vmatprep.subr.mxu0 0.0
    %433 = vmatpush1.xpose.msra.mxu0 0.0
    %434 = vmatprep.subr.mxu0 0.0
    %435 = vmatpush1.xpose.msra.mxu0 0.0
    %436 = vmatprep.subr.mxu0 0.0
    %437 = vmatpush1.xpose.msra.mxu0 0.0
    %438 = vmatprep.subr.mxu0 0.0
    %439 = vmatpush1.xpose.msra.mxu0 0.0
    %440 = vmatprep.subr.mxu0 0.0
    %441 = vmatpush1.xpose.msra.mxu0 0.0
    %442 = vmatprep.subr.mxu0 0.0
    %443 = vmatpush1.xpose.msra.mxu0 0.0
    %444 = vmatprep.subr.mxu0 0.0
    %445 = vmatpush1.xpose.msra.mxu0 0.0
    %446 = vmatprep.subr.mxu0 0.0
    %447 = vmatpush1.xpose.msra.mxu0 0.0
    %448 = vmatprep.subr.mxu0 0.0
    %449 = vmatpush1.xpose.msra.mxu0 0.0
    %450 = vmatprep.subr.mxu0 0.0
    %451 = vmatpush1.xpose.msra.mxu0 0.0
    %452 = vmatprep.subr.mxu0 0.0
    %453 = vmatpush1.xpose.msra.mxu0 0.0
    %454 = vmatprep.subr.mxu0 0.0
    %455 = vmatpush1.xpose.msra.mxu0 0.0
    %456 = vmatprep.subr.mxu0 0.0
    %457 = vmatpush1.xpose.msra.mxu0 0.0
    %458 = vmatprep.subr.mxu0 0.0
    %459 = vmatpush1.xpose.msra.mxu0 0.0
    %460 = vmatprep.subr.mxu0 0.0
    %461 = vmatpush1.xpose.msra.mxu0 0.0
    %462 = vmatprep.subr.mxu0 0.0
    %463 = vmatpush1.xpose.msra.mxu0 0.0
    %464 = vmatprep.subr.mxu0 0.0
    %465 = vmatpush1.xpose.msra.mxu0 0.0
    %466 = vmatprep.subr.mxu0 0.0
    %467 = vmatpush1.xpose.msra.mxu0 0.0
    %468 = vmatprep.subr.mxu0 0.0
    %469 = vmatpush1.xpose.msra.mxu0 0.0
    %470 = vmatprep.subr.mxu0 0.0
    %471 = vmatpush1.xpose.msra.mxu0 0.0
    %472 = vmatprep.subr.mxu0 0.0
    %473 = vmatpush1.xpose.msra.mxu0 0.0
    %474 = vmatprep.subr.mxu0 0.0
    %475 = vmatpush1.xpose.msra.mxu0 0.0
    %476 = vmatprep.subr.mxu0 0.0
    %477 = vmatpush1.xpose.msra.mxu0 0.0
    %478 = vmatprep.subr.mxu0 0.0
    %479 = vmatpush1.xpose.msra.mxu0 0.0
    %480 = vmatprep.subr.mxu0 0.0
    %481 = vmatpush1.xpose.msra.mxu0 0.0
    %482 = vmatprep.subr.mxu0 0.0
    %483 = vmatpush1.xpose.msra.mxu0 0.0
    %484 = vmatprep.subr.mxu0 0.0
    %485 = vmatpush1.xpose.msra.mxu0 0.0
    %486 = vmatprep.subr.mxu0 0.0
    %487 = vmatpush1.xpose.msra.mxu0 0.0
    %488 = vmatprep.subr.mxu0 0.0
    %489 = vmatpush1.xpose.msra.mxu0 0.0
    %490 = vmatprep.subr.mxu0 0.0
    %491 = vmatpush1.xpose.msra.mxu0 0.0
    %492 = vmatprep.subr.mxu0 0.0
    %493 = vmatpush1.xpose.msra.mxu0 0.0
    %v494 = vand.u32 %v28, 4294901760
    %495 = vmatprep.mubr.f32.mxu0 %v494
    %v496 = vand.u32 %v27, 4294901760
    %497 = vmatmul.mubr.f32.gmra.mrb[0].mxu0 %v496
    %v498 = vpop.f32.mrb[0].mxu0
    %v499 = vadd.f32 %v425, %v498
    %v500 = vpop.f32.mrb[0].mxu0
    %501 = vdwg.mxu0
    %v502 = vadd.f32 %v29, %v499
    %vm503 = vcmask 64512
    %504 = vst.msk [vmem:[#allocation5] sm:$0xff] %vm503, %v502
    // Predicated region
    $region14: #{tpu_custom_call.1} parent=1 // pred_check
      %p505 = pneg %p21
    $region15: #{tpu_custom_call.1} parent=1 // pred_check_branch
      %507 = sbr.rel (%p505) target = $region17
    $region16: #{tpu_custom_call.1} parent=1 // pred_region
      %v508 = vld [vmem:[#allocation5] sm:$0xff]
      %v509 = vmul.f32 %v508, 0.00048828125
      %510 = vst.msk [vmem:[#allocation5] sm:$0xff] %vm503, %v509
    $region17: #{tpu_custom_call.1} parent=1 // pred_fallthru
      _
    // Predicated region
    $region18: #{tpu_custom_call.1} parent=1 // pred_check
      _
    $region19: #{tpu_custom_call.1} parent=1 // pred_check_branch
      %512 = sbr.rel (0) target = $region21
    $region20: #{tpu_custom_call.1} parent=1 // pred_region
      %s514 = ssub.s32 128, 128
      %515 = vsyncadd [#allocation4], %s514
      %s517 = sshll.u32 [#allocation5], 4
      %s518 = int_to_ptr.vmem [resolvable:$true] %s517
      %520 = dma.vmem_to_hbm [thread:$0]  %s518, 128, %s1, [#allocation4]
    $region21: #{tpu_custom_call.1} parent=1 // pred_fallthru
      _
    // Predicated region
    $region22: #{tpu_custom_call.1} parent=1 // pred_check
      _
    $region23: #{tpu_custom_call.1} parent=1 // pred_check_branch
      %522 = sbr.rel (0) target = $region25
    $region24: #{tpu_custom_call.1} parent=1 // pred_region
      %523 = dma.done [#allocation4], 128
    $region25: #{tpu_custom_call.1} parent=1 // pred_fallthru
      _
    %524 = vsyncpa [#allocation3], 1
    %525 = vsyncpa [#allocation4], 1

</llo_original>
